<compile_context>
chip_gen: v7x
topology: tpu7x:2x2x1
jax: 0.10.0
libtpu: 0.0.40
codegen_flags: <defaults>
</compile_context>

<pallas_src>
import functools

import jax
import jax.numpy as jnp
from jax.experimental import pallas as pl
from jax.experimental.pallas import tpu as pltpu


# ---------------------------------------------------------------------------
# helpers
# ---------------------------------------------------------------------------
def _round_up(x, m):
    return ((x + m - 1) // m) * m


def _pick_tile(dim, cap):
    """Largest multiple-of-128 tile <= cap that divides `dim` (dim % 128 == 0)."""
    t = min(cap, dim)
    while dim % t:
        t -= 128
    return t


def _pad2d(a, rows, cols, value=0.0):
    return jnp.pad(a, ((0, rows - a.shape[0]), (0, cols - a.shape[1])),
                   constant_values=value)


# ---------------------------------------------------------------------------
# Kernel 1: tiled matmul + bias (+ optional relu), bf16 MXU / f32 accumulation
# ---------------------------------------------------------------------------
def _mm_kernel_resident(a_ref, b_ref, bias_ref, o_ref, *, apply_relu):
    # B is resident (fetched once); full-K row tile; no reduction grid axis.
    r = jnp.dot(a_ref[...], b_ref[...], preferred_element_type=jnp.float32)
    r = r + bias_ref[...]
    if apply_relu:
        r = jnp.maximum(r, 0.0)
    o_ref[...] = r.astype(o_ref.dtype)


def _mm_kernel_ktiled(a_ref, b_ref, bias_ref, o_ref, acc_ref,
                      *, apply_relu, tk, b_resident):
    k = pl.program_id(1)

    @pl.when(k == 0)
    def _():
        acc_ref[...] = jnp.zeros_like(acc_ref)

    if b_resident:
        b_blk = b_ref[pl.ds(pl.multiple_of(k * tk, 128), tk), :]
    else:
        b_blk = b_ref[...]
    acc_ref[...] += jnp.dot(a_ref[...], b_blk,
                            preferred_element_type=jnp.float32)

    @pl.when(k == pl.num_programs(1) - 1)
    def _():
        r = acc_ref[...] + bias_ref[...]
        if apply_relu:
            r = jnp.maximum(r, 0.0)
        o_ref[...] = r.astype(o_ref.dtype)


def matmul_bias_act(a, b, bias, *, apply_relu, out_dtype,
                    tile_m_cap=1024, tile_k_cap=512,
                    vmem_budget=20 * 1024 * 1024):
    """Tiled (a @ b + bias) with optional relu.  a:[M,K], b:[K,W], bias:[1,W]."""
    M, K = a.shape
    K2, W = b.shape
    assert K == K2 and bias.shape == (1, W)
    tm = _pick_tile(M, tile_m_cap)
    a_bytes = a.dtype.itemsize
    o_bytes = jnp.dtype(out_dtype).itemsize
    b_bytes = K * W * b.dtype.itemsize

    # Path 1: B fully resident (single HBM fetch), full-K row tiles.
    resident_cost = 2 * tm * K * a_bytes + b_bytes + 2 * tm * W * o_bytes + W * 4
    if resident_cost <= vmem_budget:
        return pl.pallas_call(
            functools.partial(_mm_kernel_resident, apply_relu=apply_relu),
            out_shape=jax.ShapeDtypeStruct((M, W), out_dtype),
            grid_spec=pltpu.PrefetchScalarGridSpec(
                num_scalar_prefetch=0,
                grid=(M // tm,),
                in_specs=[
                    pl.BlockSpec((tm, K), lambda i: (i, 0)),
                    pl.BlockSpec((K, W), lambda i: (0, 0)),   # fetched once
                    pl.BlockSpec((1, W), lambda i: (0, 0)),
                ],
                out_specs=pl.BlockSpec((tm, W), lambda i: (i, 0)),
            ),
            compiler_params=pltpu.CompilerParams(
                dimension_semantics=("parallel",)),
        )(a, b, bias)

    # Path 2: K-tiled accumulation.  Keep B resident (constant index_map, slice
    # with pl.ds in-kernel) when it fits; otherwise stream (tk, W) blocks.
    tk = _pick_tile(K, tile_k_cap)
    b_resident = (b_bytes + 2 * tm * tk * a_bytes + tm * W * 4
                  + 2 * tm * W * o_bytes + W * 4) <= vmem_budget
    b_spec = (pl.BlockSpec((K, W), lambda i, k: (0, 0)) if b_resident
              else pl.BlockSpec((tk, W), lambda i, k: (k, 0)))
    return pl.pallas_call(
        functools.partial(_mm_kernel_ktiled, apply_relu=apply_relu,
                          tk=tk, b_resident=b_resident),
        out_shape=jax.ShapeDtypeStruct((M, W), out_dtype),
        grid_spec=pltpu.PrefetchScalarGridSpec(
            num_scalar_prefetch=0,
            grid=(M // tm, K // tk),
            in_specs=[
                pl.BlockSpec((tm, tk), lambda i, k: (i, k)),
                b_spec,
                pl.BlockSpec((1, W), lambda i, k: (0, 0)),
            ],
            out_specs=pl.BlockSpec((tm, W), lambda i, k: (i, 0)),
            scratch_shapes=[pltpu.VMEM((tm, W), jnp.float32)],
        ),
        compiler_params=pltpu.CompilerParams(
            dimension_semantics=("parallel", "arbitrary")),
    )(a, b, bias)


# ---------------------------------------------------------------------------
# Kernel 2: fused global_max_pool + head + log_softmax
#   * 8 graphs per grid step; h_nodes stays in HBM (pl.ANY) and per-graph row
#     windows are double-buffered into VMEM with make_async_copy.
#   * per-graph (start, count) table lives in SMEM via scalar prefetch.
#   * the tiny head runs once at the last grid step on the pooled scratch.
# ---------------------------------------------------------------------------
def _pool_head_kernel(starts_ref, counts_ref,                    # SMEM prefetch
                      h_hbm,                                     # HBM (pl.ANY)
                      news_ref, w0_ref, b0_ref, wl1a_ref, wl1b_ref,
                      bl1_ref, w2_ref, b2_ref,
                      out_ref,
                      pooled_ref, hbuf, sem,
                      *, max_nodes, gb, sub_rows=256):
    blk = pl.program_id(0)
    n_pad, h_pad = h_hbm.shape
    g_pad = pooled_ref.shape[0]

    def graph_base(g):
        s = starts_ref[g]
        b = jnp.minimum(jnp.maximum((s // 8) * 8, 0), n_pad - max_nodes)
        return pl.multiple_of(b, 8)                 # sublane-aligned window

    def start_fetch(g, slot):
        pltpu.make_async_copy(h_hbm.at[pl.ds(graph_base(g), max_nodes)],
                              hbuf.at[slot], sem.at[slot]).start()

    def wait_fetch(slot):
        pltpu.make_async_copy(h_hbm.at[pl.ds(0, max_nodes)],
                              hbuf.at[slot], sem.at[slot]).wait()

    # Prime the double-buffer once at the very first grid step.
    @pl.when(blk == 0)
    def _():
        start_fetch(0, 0)

    rows = []
    for gi in range(gb):                            # static unroll over 8 graphs
        slot = gi % 2
        g = blk * gb + gi
        wait_fetch(slot)

        # Prefetch the next graph (possibly the next grid step's first graph)
        # while this graph's max is computed.  gb is even => slot parity holds
        # across grid steps.
        nxt = g + 1
        nxt_slot = (gi + 1) % 2

        @pl.when(nxt < g_pad)
        def _():
            start_fetch(nxt, nxt_slot)

        start = starts_ref[g]
        count = counts_ref[g]
        off = start - graph_base(g)
        run = jnp.full((1, h_pad), -jnp.inf, jnp.float32)
        for c0 in range(0, max_nodes, sub_rows):    # bounded vreg pressure
            csz = min(sub_rows, max_nodes - c0)
            sub = hbuf[slot, pl.ds(c0, csz), :].astype(jnp.float32)
            rid = jax.lax.broadcasted_iota(jnp.int32, (csz, 1), 0) + c0
            valid = (rid >= off) & (rid < off + count)
            run = jnp.maximum(
                run,
                jnp.max(jnp.where(valid, sub, -jnp.inf), axis=0, keepdims=True))
        rows.append(jnp.where(count > 0, run, 0.0))  # guard empty/padded graphs

    pooled_ref[pl.ds(pl.multiple_of(blk * gb, 8), gb), :] = jnp.concatenate(
        rows, axis=0)

    # ---- head (lin0 / lin1 / lin2 + log_softmax), once, at the last step.
    @pl.when(blk == pl.num_programs(0) - 1)
    def _():
        news = jnp.dot(news_ref[...], w0_ref[...],
                       preferred_element_type=jnp.float32) + b0_ref[...]
        news = jnp.maximum(news, 0.0)
        # concat([news, pooled]) @ W_lin1  ==  news @ W_a + pooled @ W_b
        z = (jnp.dot(news.astype(jnp.bfloat16), wl1a_ref[...],
                     preferred_element_type=jnp.float32)
             + jnp.dot(pooled_ref[...].astype(jnp.bfloat16), wl1b_ref[...],
                       preferred_element_type=jnp.float32)
             + bl1_ref[...])
        z = jnp.maximum(z, 0.0)
        logits = jnp.dot(z.astype(jnp.bfloat16), w2_ref[...],
                         preferred_element_type=jnp.float32) + b2_ref[...]
        # padded class columns carry a -1e30 bias -> contribute exactly 0 below
        m = jnp.max(logits, axis=-1, keepdims=True)
        lse = m + jnp.log(jnp.sum(jnp.exp(logits - m), axis=-1, keepdims=True))
        out_ref[...] = logits - lse


def pool_and_head(starts, counts, h_nodes, news_x, w0, b0,
                  wl1a, wl1b, bl1, w2, b2, *, max_nodes, graphs_per_step):
    n_pad, h_pad = h_nodes.shape
    g_pad, f_pad = news_x.shape
    c_pad = w2.shape[1]
    assert graphs_per_step % 8 == 0 and g_pad % graphs_per_step == 0
    full = lambda b, s, c: (0, 0)                 # index_maps get prefetch refs
    return pl.pallas_call(
        functools.partial(_pool_head_kernel, max_nodes=max_nodes,
                          gb=graphs_per_step),
        out_shape=jax.ShapeDtypeStruct((g_pad, c_pad), jnp.float32),
        grid_spec=pltpu.PrefetchScalarGridSpec(
            num_scalar_prefetch=2,                # starts, counts -> SMEM
            grid=(g_pad // graphs_per_step,),
            in_specs=[
                pl.BlockSpec(memory_space=pl.ANY),    # h_nodes stays in HBM
                pl.BlockSpec((g_pad, f_pad), full),   # x[root] (bf16)
                pl.BlockSpec(w0.shape, full),
                pl.BlockSpec(b0.shape, full),
                pl.BlockSpec(wl1a.shape, full),
                pl.BlockSpec(wl1b.shape, full),
                pl.BlockSpec(bl1.shape, full),
                pl.BlockSpec(w2.shape, full),
                pl.BlockSpec(b2.shape, full),
            ],
            out_specs=pl.BlockSpec((g_pad, c_pad), full),
            scratch_shapes=[
                pltpu.VMEM((g_pad, h_pad), jnp.float32),           # pooled
                pltpu.VMEM((2, max_nodes, h_pad), h_nodes.dtype),  # DMA buffer
                pltpu.SemaphoreType.DMA((2,)),
            ],
        ),
        compiler_params=pltpu.CompilerParams(
            dimension_semantics=("arbitrary",)),
    )(starts, counts, h_nodes, news_x, w0, b0, wl1a, wl1b, bl1, w2, b2)


# ---------------------------------------------------------------------------
# Glue (plain JAX): normalized adjacency, padding, segmentation, root gather
# ---------------------------------------------------------------------------
def build_gcn_adj(edge_index, num_nodes):
    """Dense D^-1/2 (A + I) D^-1/2 from an (undirected) edge_index [2, E]."""
    src, dst = edge_index[0], edge_index[1]
    A = jnp.zeros((num_nodes, num_nodes), jnp.float32)
    A = A.at[dst, src].set(1.0)                     # message src -> dst
    A = A + jnp.eye(num_nodes, dtype=jnp.float32)   # self loops
    deg = jnp.sum(A, axis=1)
    dinv = jax.lax.rsqrt(deg)
    return dinv[:, None] * A * dinv[None, :]


def upfd_net_forward(x, edge_index, batch, params, num_graphs, *,
                     max_nodes_per_graph, graphs_per_step=8):
    # NOTE: assumes `batch` is sorted ascending (PyG DataLoader guarantee) --
    # the original PyTorch root-detection relies on the same property.
    N, F = x.shape
    H = params["w1"].shape[1]
    C = params["w2"].shape[1]

    n_pad = _round_up(N, 128)
    f_pad = _round_up(F, 128)
    h_pad = _round_up(H, 128)
    c_pad = _round_up(C, 128)
    g_pad = _round_up(num_graphs, graphs_per_step)

    # per-graph contiguous node ranges (start, count) for SMEM scalar prefetch
    gids = jnp.arange(g_pad, dtype=batch.dtype)
    counts = jnp.sum(batch[None, :] == gids[:, None], axis=1).astype(jnp.int32)
    starts = (jnp.cumsum(counts) - counts).astype(jnp.int32)

    # static per-graph node bound (no device->host sync; wrapper is jittable)
    max_nodes = min(_round_up(max_nodes_per_graph, 8) + 8, n_pad)

    # padded / bf16 matmul operands (f32 biases, f32 elementwise in-kernel)
    a_norm = _pad2d(build_gcn_adj(edge_index, N), n_pad, n_pad).astype(jnp.bfloat16)
    x_mm = _pad2d(x, n_pad, f_pad).astype(jnp.bfloat16)

    w1 = _pad2d(params["w1"], f_pad, h_pad).astype(jnp.bfloat16)
    b1 = _pad2d(params["b1"], 1, h_pad)
    w0 = _pad2d(params["w0"], f_pad, h_pad).astype(jnp.bfloat16)
    b0 = _pad2d(params["b0"], 1, h_pad)
    wl1a = _pad2d(params["wl1a"], h_pad, h_pad).astype(jnp.bfloat16)
    wl1b = _pad2d(params["wl1b"], h_pad, h_pad).astype(jnp.bfloat16)
    bl1 = _pad2d(params["bl1"], 1, h_pad)
    w2 = _pad2d(params["w2"], h_pad, c_pad).astype(jnp.bfloat16)
    # padded class columns: -1e30 bias => ignored by the in-kernel log_softmax
    b2 = jnp.pad(params["b2"], ((0, 0), (0, c_pad - C)), constant_values=-1e30)

    zero_bias_h = jnp.zeros((1, h_pad), jnp.float32)
    zero_bias_f = jnp.zeros((1, f_pad), jnp.float32)

    # GCNConv + relu; contraction order chosen at trace time (F vs H).
    # h_nodes emitted in bf16: max-pool is exact in bf16 and the head casts to
    # bf16 anyway -> halves HBM writeback/read.
    if F >= H:
        xw = matmul_bias_act(x_mm, w1, zero_bias_h,
                             apply_relu=False, out_dtype=jnp.bfloat16)
        h_nodes = matmul_bias_act(a_norm, xw, b1,
                                  apply_relu=True, out_dtype=jnp.bfloat16)
    else:
        ax = matmul_bias_act(a_norm, x_mm, zero_bias_f,
                             apply_relu=False, out_dtype=jnp.bfloat16)
        h_nodes = matmul_bias_act(ax, w1, b1,
                                  apply_relu=True, out_dtype=jnp.bfloat16)

    # roots = first node of each graph (== starts, batch sorted); fused pool+head
    news_x = _pad2d(x[starts[:num_graphs]], g_pad, f_pad).astype(jnp.bfloat16)
    out = pool_and_head(starts, counts, h_nodes, news_x, w0, b0,
                        wl1a, wl1b, bl1, w2, b2,
                        max_nodes=max_nodes, graphs_per_step=graphs_per_step)
    return out[:num_graphs, :C]


# ---------------------------------------------------------------------------
# Deterministic parameter init (shapes follow Net(in=F, hidden=H, out=C))
# ---------------------------------------------------------------------------
def init_params(key, F, H, C):
    ks = jax.random.split(key, 8)
    s = 0.1
    return {
        # GCNConv(in_channels, hidden_channels): weight [F, H], bias [1, H]
        "w1": s * jax.random.normal(ks[0], (F, H), jnp.float32),
        "b1": s * jax.random.normal(ks[1], (1, H), jnp.float32),
        # lin0: Linear(F, H)
        "w0": s * jax.random.normal(ks[2], (F, H), jnp.float32),
        "b0": s * jax.random.normal(ks[3], (1, H), jnp.float32),
        # lin1: Linear(2H, H), split into the news-half and pooled-half
        "wl1a": s * jax.random.normal(ks[4], (H, H), jnp.float32),
        "wl1b": s * jax.random.normal(ks[5], (H, H), jnp.float32),
        "bl1": s * jax.random.normal(ks[6], (1, H), jnp.float32),
        # lin2: Linear(H, C)
        "w2": s * jax.random.normal(ks[7], (H, C), jnp.float32),
        "b2": jnp.zeros((1, C), jnp.float32),
    }


# ---------------------------------------------------------------------------
# Pure-JAX f32 reference (for correctness check only)
# ---------------------------------------------------------------------------
def _reference_forward(x, edge_index, batch, params, num_graphs):
    N = x.shape[0]
    a = build_gcn_adj(edge_index, N)
    h = jnp.maximum(a @ x @ params["w1"] + params["b1"], 0.0)
    gids = jnp.arange(num_graphs)
    mask = batch[None, :] == gids[:, None]
    pooled = jnp.max(jnp.where(mask[:, :, None], h[None], -jnp.inf), axis=1)
    counts = jnp.sum(mask, axis=1)
    starts = jnp.cumsum(counts) - counts
    news = jnp.maximum(x[starts] @ params["w0"] + params["b0"], 0.0)
    z = jnp.maximum(news @ params["wl1a"] + pooled @ params["wl1b"]
                    + params["bl1"], 0.0)
    logits = z @ params["w2"] + params["b2"]
    return jax.nn.log_softmax(logits, axis=-1)


if __name__ == "__main__":
    # 2 star graphs of 8 nodes each (UPFD-style trees), in_channels F=16,
    # hidden H=128 (as in the reference instantiation), num_classes C=4.
    N, F, H, C, G = 16, 16, 128, 4, 2

    key = jax.random.PRNGKey(0)
    kx, kp = jax.random.split(key)
    x = jax.random.normal(kx, (N, F), jnp.float32)
    params = init_params(kp, F, H, C)

    # batch assignment: nodes 0..7 -> graph 0, nodes 8..15 -> graph 1 (sorted)
    batch = jnp.concatenate([jnp.zeros((8,), jnp.int32),
                             jnp.ones((8,), jnp.int32)])

    # star/tree edges per graph, made undirected (ToUndirected)
    src = jnp.array([0, 0, 0, 0, 0, 0, 0, 8, 8, 8, 8, 8, 8, 8], jnp.int32)
    dst = jnp.array([1, 2, 3, 4, 5, 6, 7, 9, 10, 11, 12, 13, 14, 15], jnp.int32)
    edge_index = jnp.stack([jnp.concatenate([src, dst]),
                            jnp.concatenate([dst, src])], axis=0)

    out = upfd_net_forward(x, edge_index, batch, params, num_graphs=G,
                           max_nodes_per_graph=8)
    out = jax.block_until_ready(out)

    assert out.shape == (G, C)
    # rows of log_softmax must exp-sum to 1
    assert jnp.allclose(jnp.sum(jnp.exp(out), axis=-1), 1.0, atol=1e-5)
    # match the f32 reference (kernel uses bf16 matmul operands -> loose tol)
    ref = _reference_forward(x, edge_index, batch, params, G)
    assert jnp.max(jnp.abs(out - ref)) < 0.1
    print("KERNEL_OK")
</pallas_src>

<mosaic_0001>
module attributes {stable_mosaic.version = 11 : i64} {
  func.func @_mm_kernel_resident(%arg0: i32, %arg1: memref<128x128xbf16, #tpu.memory_space<vmem>>, %arg2: memref<128x128xbf16, #tpu.memory_space<vmem>>, %arg3: memref<1x128xf32, #tpu.memory_space<vmem>>, %arg4: memref<128x128xbf16, #tpu.memory_space<vmem>>) attributes {dimension_semantics = [#tpu.dimension_semantics<parallel>], iteration_bounds = array<i64: 1>, scalar_prefetch = 0 : i64, scratch_operands = 0 : i64, tpu.core_type = #tpu.core_type<tc>, window_params = [{transform_indices = @transform_0, window_bounds = array<i64: 128, 128>}, {pipeline_mode = #tpu.pipeline_mode<synchronous>, transform_indices = @transform_1, window_bounds = array<i64: 128, 128>}, {pipeline_mode = #tpu.pipeline_mode<synchronous>, transform_indices = @transform_2, window_bounds = array<i64: 1, 128>}, {transform_indices = @transform_3, window_bounds = array<i64: 128, 128>}]} {
    %c0 = arith.constant 0 : index
    %c0_0 = arith.constant 0 : index
    %0 = vector.load %arg1[%c0, %c0_0] : memref<128x128xbf16, #tpu.memory_space<vmem>>, vector<128x128xbf16>
    %c0_1 = arith.constant 0 : index
    %c0_2 = arith.constant 0 : index
    %1 = vector.load %arg2[%c0_1, %c0_2] : memref<128x128xbf16, #tpu.memory_space<vmem>>, vector<128x128xbf16>
    %cst = arith.constant dense<0.000000e+00> : vector<128x128xf32>
    %2 = tpu.matmul %0, %1, %cst {dimension_numbers = #tpu.dot_dimension_numbers<[1], [0], [0], [1], [0, 0, 1, 1], [], []>} : vector<128x128xbf16>, vector<128x128xbf16>, vector<128x128xf32> -> vector<128x128xf32>
    %c0_3 = arith.constant 0 : index
    %c0_4 = arith.constant 0 : index
    %3 = vector.load %arg3[%c0_3, %c0_4] : memref<1x128xf32, #tpu.memory_space<vmem>>, vector<1x128xf32>
    %4 = vector.broadcast %3 : vector<1x128xf32> to vector<128x128xf32>
    %5 = arith.addf %2, %4 : vector<128x128xf32>
    %6 = arith.truncf %5 : vector<128x128xf32> to vector<128x128xbf16>
    %c0_5 = arith.constant 0 : index
    %c0_6 = arith.constant 0 : index
    %7 = vector.load %arg4[%c0_5, %c0_6] : memref<128x128xbf16, #tpu.memory_space<vmem>>, vector<128x128xbf16>
    tpu.vector_store %arg4[%c0_5, %c0_6], %6 {strides = array<i32>} : memref<128x128xbf16, #tpu.memory_space<vmem>>, vector<128x128xbf16>,
    return
  }
  func.func @transform_0(%arg0: i32) -> (i32, i32) {
    %c0_i32 = arith.constant 0 : i32
    %c0_i32_0 = arith.constant 0 : i32
    return %arg0, %c0_i32 : i32, i32
  }
  func.func @transform_1(%arg0: i32) -> (i32, i32) {
    %c0_i32 = arith.constant 0 : i32
    %c0_i32_0 = arith.constant 0 : i32
    %c0_i32_1 = arith.constant 0 : i32
    return %c0_i32, %c0_i32_0 : i32, i32
  }
  func.func @transform_2(%arg0: i32) -> (i32, i32) {
    %c0_i32 = arith.constant 0 : i32
    %c0_i32_0 = arith.constant 0 : i32
    %c0_i32_1 = arith.constant 0 : i32
    return %c0_i32, %c0_i32_0 : i32, i32
  }
  func.func @transform_3(%arg0: i32) -> (i32, i32) {
    %c0_i32 = arith.constant 0 : i32
    %c0_i32_0 = arith.constant 0 : i32
    return %arg0, %c0_i32 : i32, i32
  }
}

</mosaic_0001>

<llo_original>
// kernel: tpu_custom_call.1
$region0: #{tpu_custom_call.1}
  #allocation0 [shape = 'u32[]', space=smem, size = 0x4, offset = 0x4, fixed_abs, tag = 'smem constant byte address 0x4 - core index']
  #allocation1 [shape = 'u32[144,128]{1,0:T(1,128)}', space=vmem, size = 0x12000, scoped, tag = 'internal scratch']
  %s0 = inlined_call_operand.hbm [shape: bf16[128,128], index: 0, kind: input, shape index: {}]
  %s1 = inlined_call_operand.hbm [shape: bf16[128,128], index: 1, kind: input, shape index: {}]
  %s2 = inlined_call_operand.vmem [shape: f32[1,128], index: 2, kind: input, shape index: {}]
  %s3 = inlined_call_operand.hbm [shape: bf16[128,128], index: 3, kind: output, shape index: {}]
  %s4 = sld [smem:[#allocation0]]
  $region30: #{tpu_custom_call.1} parent=0
    _
  %s6 = ssub.s32 1, %s4
  %s7 = scalar_select 0, %s6, %s4
  $region1: #{tpu_custom_call.1} parent=0
    #allocation2 [shape = 'u8[32768]{0}', space=vmem, size = 0x8000, scoped, tag = 'input window, operand 0, single buffered']
    #allocation3 [shape = 's32[1]{0}', space=sflag, size = 0x4, scoped, tag = 'scoped memory for tpu_custom_call.1']
    #allocation4 [shape = 's32[1]{0}', space=sflag, size = 0x4, scoped, tag = 'scoped memory for tpu_custom_call.1']
    #allocation5 [shape = 'u8[32768]{0}', space=vmem, size = 0x8000, scoped, tag = 'input window, operand 1, single buffered']
    #allocation6 [shape = 's32[1]{0}', space=sflag, size = 0x4, scoped, tag = 'scoped memory for tpu_custom_call.1']
    #allocation7 [shape = 'u8[32768]{0}', space=vmem, size = 0x8000, scoped, tag = 'output window, operand 0, single buffered']
    %8 = vsyncpa [#allocation3], 0
    %9 = vsyncpa [#allocation6], 0
    %10 = vsyncpa [#allocation4], 0
    // Predicated region
    $region2: #{tpu_custom_call.1} parent=1 // pred_check
      _
    $region3: #{tpu_custom_call.1} parent=1 // pred_check_branch
      %12 = sbr.rel (0) target = $region5
    $region4: #{tpu_custom_call.1} parent=1 // pred_region
      %s14 = ssub.s32 1024, 1024
      %15 = vsyncadd [#allocation3], %s14
      %s16 = sshll.u32 [#allocation2], 4
      %s17 = int_to_ptr.vmem [resolvable:$true] %s16
      %22 = dma.hbm_to_vmem [thread:$0]  %s0, 1024, %s17, [#allocation3], 64, 64, 4
    $region5: #{tpu_custom_call.1} parent=1 // pred_fallthru
      _
    // Predicated region
    $region6: #{tpu_custom_call.1} parent=1 // pred_check
      _
    $region7: #{tpu_custom_call.1} parent=1 // pred_check_branch
      %24 = sbr.rel (0) target = $region9
    $region8: #{tpu_custom_call.1} parent=1 // pred_region
      %s26 = ssub.s32 1024, 1024
      %27 = vsyncadd [#allocation6], %s26
      %s28 = sshll.u32 [#allocation5], 4
      %s29 = int_to_ptr.vmem [resolvable:$true] %s28
      %34 = dma.hbm_to_vmem [thread:$0]  %s1, 1024, %s29, [#allocation6], 64, 64, 4
    $region9: #{tpu_custom_call.1} parent=1 // pred_fallthru
      _
    // Predicated region
    $region10: #{tpu_custom_call.1} parent=1 // pred_check
      _
    $region11: #{tpu_custom_call.1} parent=1 // pred_check_branch
      %36 = sbr.rel (0) target = $region13
    $region12: #{tpu_custom_call.1} parent=1 // pred_region
      _
    $region13: #{tpu_custom_call.1} parent=1 // pred_fallthru
      _
    // Predicated region
    $region14: #{tpu_custom_call.1} parent=1 // pred_check
      _
    $region15: #{tpu_custom_call.1} parent=1 // pred_check_branch
      %38 = sbr.rel (0) target = $region17
    $region16: #{tpu_custom_call.1} parent=1 // pred_region
      %39 = dma.done [#allocation3], 1024
    $region17: #{tpu_custom_call.1} parent=1 // pred_fallthru
      _
    // Predicated region
    $region18: #{tpu_custom_call.1} parent=1 // pred_check
      _
    $region19: #{tpu_custom_call.1} parent=1 // pred_check_branch
      %41 = sbr.rel (0) target = $region21
    $region20: #{tpu_custom_call.1} parent=1 // pred_region
      %42 = dma.done [#allocation6], 1024
    $region21: #{tpu_custom_call.1} parent=1 // pred_fallthru
      _
    %v44 = vld [vmem:[#allocation2] sm:$0xf]
    %v45 = vld [vmem:[#allocation2 + $0x4] sm:$0xf]
    %v46 = vld [vmem:[#allocation2 + $0x8] sm:$0xf]
    %v47 = vld [vmem:[#allocation2 + $0xc] sm:$0xf]
    %v48 = vld [vmem:[#allocation2 + $0x10] sm:$0xf]
    %v49 = vld [vmem:[#allocation2 + $0x14] sm:$0xf]
    %v50 = vld [vmem:[#allocation2 + $0x18] sm:$0xf]
    %v51 = vld [vmem:[#allocation2 + $0x1c] sm:$0xf]
    %v52 = vld [vmem:[#allocation2 + $0x20] sm:$0xf]
    %v53 = vld [vmem:[#allocation2 + $0x24] sm:$0xf]
    %v54 = vld [vmem:[#allocation2 + $0x28] sm:$0xf]
    %v55 = vld [vmem:[#allocation2 + $0x2c] sm:$0xf]
    %v56 = vld [vmem:[#allocation2 + $0x30] sm:$0xf]
    %v57 = vld [vmem:[#allocation2 + $0x34] sm:$0xf]
    %v58 = vld [vmem:[#allocation2 + $0x38] sm:$0xf]
    %v59 = vld [vmem:[#allocation2 + $0x3c] sm:$0xf]
    %v60 = vld [vmem:[#allocation5] sm:$0xf]
    %v61 = vld [vmem:[#allocation5 + $0x4] sm:$0xf]
    %v62 = vld [vmem:[#allocation5 + $0x8] sm:$0xf]
    %v63 = vld [vmem:[#allocation5 + $0xc] sm:$0xf]
    %v64 = vld [vmem:[#allocation5 + $0x10] sm:$0xf]
    %v65 = vld [vmem:[#allocation5 + $0x14] sm:$0xf]
    %v66 = vld [vmem:[#allocation5 + $0x18] sm:$0xf]
    %v67 = vld [vmem:[#allocation5 + $0x1c] sm:$0xf]
    %v68 = vld [vmem:[#allocation5 + $0x20] sm:$0xf]
    %v69 = vld [vmem:[#allocation5 + $0x24] sm:$0xf]
    %v70 = vld [vmem:[#allocation5 + $0x28] sm:$0xf]
    %v71 = vld [vmem:[#allocation5 + $0x2c] sm:$0xf]
    %v72 = vld [vmem:[#allocation5 + $0x30] sm:$0xf]
    %v73 = vld [vmem:[#allocation5 + $0x34] sm:$0xf]
    %v74 = vld [vmem:[#allocation5 + $0x38] sm:$0xf]
    %v75 = vld [vmem:[#allocation5 + $0x3c] sm:$0xf]
    %v76 = vld [vmem:[%s2] sm:$0x1]
    %v78 = vlaneseq
    %v79 = vshrl.u32 %v78, 7
    %v80 = vsub.s32 0, %v79
    %v81 = vrot.slane %v76, %v80
    %v99 = vunpack.c.l.b16 %v44
    %v100 = vunpack.c.l.b16 %v45
    %v101 = vunpack.c.l.b16 %v46
    %v102 = vunpack.c.l.b16 %v47
    %v103 = vunpack.c.l.b16 %v48
    %v104 = vunpack.c.l.b16 %v49
    %v105 = vunpack.c.l.b16 %v50
    %v106 = vunpack.c.l.b16 %v51
    %v107 = vunpack.c.l.b16 %v52
    %v108 = vunpack.c.l.b16 %v53
    %v109 = vunpack.c.l.b16 %v54
    %v110 = vunpack.c.l.b16 %v55
    %v111 = vunpack.c.l.b16 %v56
    %v112 = vunpack.c.l.b16 %v57
    %v113 = vunpack.c.l.b16 %v58
    %v114 = vunpack.c.l.b16 %v59
    %v115 = vpack.c.b16 %v100, %v99
    %v116 = vpack.c.b16 %v102, %v101
    %v117 = vpack.c.b16 %v104, %v103
    %v118 = vpack.c.b16 %v106, %v105
    %v119 = vpack.c.b16 %v108, %v107
    %v120 = vpack.c.b16 %v110, %v109
    %v121 = vpack.c.b16 %v112, %v111
    %v122 = vpack.c.b16 %v114, %v113
    %v147 = vunpack.c.l.b16 %v60
    %v148 = vunpack.c.l.b16 %v61
    %v149 = vunpack.c.l.b16 %v62
    %v150 = vunpack.c.l.b16 %v63
    %v151 = vunpack.c.l.b16 %v64
    %v152 = vunpack.c.l.b16 %v65
    %v153 = vunpack.c.l.b16 %v66
    %v154 = vunpack.c.l.b16 %v67
    %v155 = vunpack.c.l.b16 %v68
    %v156 = vunpack.c.l.b16 %v69
    %v157 = vunpack.c.l.b16 %v70
    %v158 = vunpack.c.l.b16 %v71
    %v159 = vunpack.c.l.b16 %v72
    %v160 = vunpack.c.l.b16 %v73
    %v161 = vunpack.c.l.b16 %v74
    %v162 = vunpack.c.l.b16 %v75
    %v163 = vpack.c.b16 %v148, %v147
    %v164 = vpack.c.b16 %v150, %v149
    %v165 = vpack.c.b16 %v152, %v151
    %v166 = vpack.c.b16 %v154, %v153
    %v167 = vpack.c.b16 %v156, %v155
    %v168 = vpack.c.b16 %v158, %v157
    %v169 = vpack.c.b16 %v160, %v159
    %v170 = vpack.c.b16 %v162, %v161
    %179 = vmatprep.subr.bf16.mxu0 0
    %180 = vmatpush1.bf16.msra.mxu0 %v163
    %181 = vmatprep.subr.bf16.mxu0 0
    %182 = vmatpush1.bf16.msra.mxu0 %v164
    %183 = vmatprep.subr.bf16.mxu0 0
    %184 = vmatpush1.bf16.msra.mxu0 %v165
    %185 = vmatprep.subr.bf16.mxu0 0
    %186 = vmatpush1.bf16.msra.mxu0 %v166
    %187 = vmatprep.subr.bf16.mxu0 0
    %188 = vmatpush1.bf16.msra.mxu0 %v167
    %189 = vmatprep.subr.bf16.mxu0 0
    %190 = vmatpush1.bf16.msra.mxu0 %v168
    %191 = vmatprep.subr.bf16.mxu0 0
    %192 = vmatpush1.bf16.msra.mxu0 %v169
    %193 = vmatprep.subr.bf16.mxu0 0
    %194 = vmatpush1.bf16.msra.mxu0 %v170
    %195 = vmatprep.subr.bf16.mxu0 0
    %196 = vmatpush1.bf16.msra.mxu0 0
    %197 = vmatprep.subr.bf16.mxu0 0
    %198 = vmatpush1.bf16.msra.mxu0 0
    %199 = vmatprep.subr.bf16.mxu0 0
    %200 = vmatpush1.bf16.msra.mxu0 0
    %201 = vmatprep.subr.bf16.mxu0 0
    %202 = vmatpush1.bf16.msra.mxu0 0
    %203 = vmatprep.subr.bf16.mxu0 0
    %204 = vmatpush1.bf16.msra.mxu0 0
    %205 = vmatprep.subr.bf16.mxu0 0
    %206 = vmatpush1.bf16.msra.mxu0 0
    %207 = vmatprep.subr.bf16.mxu0 0
    %208 = vmatpush1.bf16.msra.mxu0 0
    %209 = vmatprep.subr.bf16.mxu0 0
    %210 = vmatpush1.bf16.msra.mxu0 0
    %211 = vmatprep.mubr.bf16.mxu0 0
    %212 = vmatmul.mubr.bf16.gmra.mrb[0].mxu0 %v115
    %v213 = vpop.f32.mrb[0].mxu0
    %v214 = vadd.f32 %v81, %v213
    %v215 = vpop.f32.mrb[0].mxu0
    %v216 = vpop.f32.mrb[0].mxu0
    %v217 = vadd.f32 %v81, %v216
    %v218 = vpop.f32.mrb[0].mxu0
    %219 = vmatprep.mubr.bf16.mxu0 0
    %220 = vmatmul.mubr.bf16.gmra.mrb[0].mxu0 %v116
    %v221 = vpop.f32.mrb[0].mxu0
    %v222 = vadd.f32 %v81, %v221
    %v223 = vpop.f32.mrb[0].mxu0
    %v224 = vpop.f32.mrb[0].mxu0
    %v225 = vadd.f32 %v81, %v224
    %v226 = vpop.f32.mrb[0].mxu0
    %227 = vmatprep.mubr.bf16.mxu0 0
    %228 = vmatmul.mubr.bf16.gmra.mrb[0].mxu0 %v117
    %v229 = vpop.f32.mrb[0].mxu0
    %v230 = vadd.f32 %v81, %v229
    %v231 = vpop.f32.mrb[0].mxu0
    %v232 = vpop.f32.mrb[0].mxu0
    %v233 = vadd.f32 %v81, %v232
    %v234 = vpop.f32.mrb[0].mxu0
    %235 = vmatprep.mubr.bf16.mxu0 0
    %236 = vmatmul.mubr.bf16.gmra.mrb[0].mxu0 %v118
    %v237 = vpop.f32.mrb[0].mxu0
    %v238 = vadd.f32 %v81, %v237
    %v239 = vpop.f32.mrb[0].mxu0
    %v240 = vpop.f32.mrb[0].mxu0
    %v241 = vadd.f32 %v81, %v240
    %v242 = vpop.f32.mrb[0].mxu0
    %243 = vmatprep.mubr.bf16.mxu0 0
    %244 = vmatmul.mubr.bf16.gmra.mrb[0].mxu0 %v119
    %v245 = vpop.f32.mrb[0].mxu0
    %v246 = vadd.f32 %v81, %v245
    %v247 = vpop.f32.mrb[0].mxu0
    %v248 = vpop.f32.mrb[0].mxu0
    %v249 = vadd.f32 %v81, %v248
    %v250 = vpop.f32.mrb[0].mxu0
    %251 = vmatprep.mubr.bf16.mxu0 0
    %252 = vmatmul.mubr.bf16.gmra.mrb[0].mxu0 %v120
    %v253 = vpop.f32.mrb[0].mxu0
    %v254 = vadd.f32 %v81, %v253
    %v255 = vpop.f32.mrb[0].mxu0
    %v256 = vpop.f32.mrb[0].mxu0
    %v257 = vadd.f32 %v81, %v256
    %v258 = vpop.f32.mrb[0].mxu0
    %259 = vmatprep.mubr.bf16.mxu0 0
    %260 = vmatmul.mubr.bf16.gmra.mrb[0].mxu0 %v121
    %v261 = vpop.f32.mrb[0].mxu0
    %v262 = vadd.f32 %v81, %v261
    %v263 = vpop.f32.mrb[0].mxu0
    %v264 = vpop.f32.mrb[0].mxu0
    %v265 = vadd.f32 %v81, %v264
    %v266 = vpop.f32.mrb[0].mxu0
    %267 = vmatprep.mubr.bf16.mxu0 0
    %268 = vmatmul.mubr.bf16.gmra.mrb[0].mxu0 %v122
    %v269 = vpop.f32.mrb[0].mxu0
    %v270 = vadd.f32 %v81, %v269
    %v271 = vpop.f32.mrb[0].mxu0
    %v272 = vpop.f32.mrb[0].mxu0
    %v273 = vadd.f32 %v81, %v272
    %v274 = vpop.f32.mrb[0].mxu0
    %275 = vdwg.mxu0
    %v276 = vpack.c.bf16 %v217, %v214
    %v277 = vpack.c.bf16 %v225, %v222
    %v278 = vpack.c.bf16 %v233, %v230
    %v279 = vpack.c.bf16 %v241, %v238
    %v280 = vpack.c.bf16 %v249, %v246
    %v281 = vpack.c.bf16 %v257, %v254
    %v282 = vpack.c.bf16 %v265, %v262
    %v283 = vpack.c.bf16 %v273, %v270
    %v292 = vunpack.c.l.b16 %v276
    %v293 = vunpack.c.h.b16 %v276
    %v294 = vunpack.c.l.b16 %v277
    %v295 = vunpack.c.h.b16 %v277
    %v296 = vunpack.c.l.b16 %v278
    %v297 = vunpack.c.h.b16 %v278
    %v298 = vunpack.c.l.b16 %v279
    %v299 = vunpack.c.h.b16 %v279
    %v300 = vunpack.c.l.b16 %v280
    %v301 = vunpack.c.h.b16 %v280
    %v302 = vunpack.c.l.b16 %v281
    %v303 = vunpack.c.h.b16 %v281
    %v304 = vunpack.c.l.b16 %v282
    %v305 = vunpack.c.h.b16 %v282
    %v306 = vunpack.c.l.b16 %v283
    %v307 = vunpack.c.h.b16 %v283
    %v308 = vpack.c.b16 %v292, %v292
    %v309 = vpack.c.b16 %v293, %v293
    %v310 = vpack.c.b16 %v294, %v294
    %v311 = vpack.c.b16 %v295, %v295
    %v312 = vpack.c.b16 %v296, %v296
    %v313 = vpack.c.b16 %v297, %v297
    %v314 = vpack.c.b16 %v298, %v298
    %v315 = vpack.c.b16 %v299, %v299
    %v316 = vpack.c.b16 %v300, %v300
    %v317 = vpack.c.b16 %v301, %v301
    %v318 = vpack.c.b16 %v302, %v302
    %v319 = vpack.c.b16 %v303, %v303
    %v320 = vpack.c.b16 %v304, %v304
    %v321 = vpack.c.b16 %v305, %v305
    %v322 = vpack.c.b16 %v306, %v306
    %v323 = vpack.c.b16 %v307, %v307
    %340 = vst [vmem:[#allocation7] sm:$0xf] %v308
    %341 = vst [vmem:[#allocation7 + $0x4] sm:$0xf] %v309
    %342 = vst [vmem:[#allocation7 + $0x8] sm:$0xf] %v310
    %343 = vst [vmem:[#allocation7 + $0xc] sm:$0xf] %v311
    %344 = vst [vmem:[#allocation7 + $0x10] sm:$0xf] %v312
    %345 = vst [vmem:[#allocation7 + $0x14] sm:$0xf] %v313
    %346 = vst [vmem:[#allocation7 + $0x18] sm:$0xf] %v314
    %347 = vst [vmem:[#allocation7 + $0x1c] sm:$0xf] %v315
    %348 = vst [vmem:[#allocation7 + $0x20] sm:$0xf] %v316
    %349 = vst [vmem:[#allocation7 + $0x24] sm:$0xf] %v317
    %350 = vst [vmem:[#allocation7 + $0x28] sm:$0xf] %v318
    %351 = vst [vmem:[#allocation7 + $0x2c] sm:$0xf] %v319
    %352 = vst [vmem:[#allocation7 + $0x30] sm:$0xf] %v320
    %353 = vst [vmem:[#allocation7 + $0x34] sm:$0xf] %v321
    %354 = vst [vmem:[#allocation7 + $0x38] sm:$0xf] %v322
    %355 = vst [vmem:[#allocation7 + $0x3c] sm:$0xf] %v323
    // Predicated region
    $region22: #{tpu_custom_call.1} parent=1 // pred_check
      _
    $region23: #{tpu_custom_call.1} parent=1 // pred_check_branch
      %357 = sbr.rel (0) target = $region25
    $region24: #{tpu_custom_call.1} parent=1 // pred_region
      %s359 = ssub.s32 1024, 1024
      %360 = vsyncadd [#allocation4], %s359
      %s361 = sshll.u32 [#allocation7], 4
      %s362 = int_to_ptr.vmem [resolvable:$true] %s361
      %367 = dma.vmem_to_hbm [thread:$0]  %s362, 1024, %s3, [#allocation4], 64, 64, 4
    $region25: #{tpu_custom_call.1} parent=1 // pred_fallthru
      _
    // Predicated region
    $region26: #{tpu_custom_call.1} parent=1 // pred_check
      _
    $region27: #{tpu_custom_call.1} parent=1 // pred_check_branch
      %369 = sbr.rel (0) target = $region29
    $region28: #{tpu_custom_call.1} parent=1 // pred_region
      %370 = dma.done [#allocation4], 1024
    $region29: #{tpu_custom_call.1} parent=1 // pred_fallthru
      _
    %371 = vsyncpa [#allocation3], 1
    %372 = vsyncpa [#allocation6], 1
    %373 = vsyncpa [#allocation4], 1

</llo_original>
